<compile_context>
chip_gen: v7x
topology: tpu7x:2x2x1
jax: 0.10.0
libtpu: 0.0.40
codegen_flags: <defaults>
</compile_context>

<pallas_src>
import functools

import jax
import jax.numpy as jnp
from jax.experimental import pallas as pl
from jax.experimental.pallas import tpu as pltpu


def _distill_kernel(s_ref, t_ref, lbl_ref, out_ref, *, temperature,
                    alpha_distil, alpha_hard, batch_size, int_T):
    i = pl.program_id(0)
    s = s_ref[...].astype(jnp.float32)          # (TB, C) student logits
    t = t_ref[...].astype(jnp.float32)          # (TB, C) teacher logits
    lbl = lbl_ref[...]                          # (TB, 1) int32 class indices
    TB, C = s.shape

    inv_T = jnp.float32(1.0 / temperature)
    T2 = jnp.float32(temperature * temperature)
    inv_B = jnp.float32(1.0 / batch_size)

    # Row-validity mask: handles batch padding (padded rows contribute 0).
    row_idx = i * TB + jax.lax.broadcasted_iota(jnp.int32, (TB, 1), 0)
    valid = (row_idx < batch_size).astype(jnp.float32)        # (TB, 1)

    # --- teacher softmax at temperature T (unnormalized; per-row reciprocal) ---
    t_s = t * inv_T
    t_max = jnp.max(t_s, axis=-1, keepdims=True)
    t_shift = t_s - t_max
    t_exp = jnp.exp(t_shift)
    t_sum = jnp.sum(t_exp, axis=-1, keepdims=True)            # (TB, 1)
    t_logsum = jnp.log(t_sum)

    # --- student: single row-max on un-scaled logits, shared by KL and CE ---
    m = jnp.max(s, axis=-1, keepdims=True)                    # (TB, 1)
    d = s - m                                                 # shared shifted logits
    s_shift = d * inv_T                                       # == s/T - max(s/T)
    e_T = jnp.exp(s_shift)                                    # exp at temperature T
    s_sum = jnp.sum(e_T, axis=-1, keepdims=True)
    s_logsum = jnp.log(s_sum)

    # --- KL per row: sum_c p*(log p - log q)
    #   = (1/t_sum) * sum_c t_exp*(t_shift - s_shift) + (s_logsum - t_logsum) ---
    inv_tsum = pl.reciprocal(t_sum, approx=True)              # (TB, 1) EUP vrcp
    kl_row = (inv_tsum * jnp.sum(t_exp * (t_shift - s_shift), axis=-1, keepdims=True)
              + (s_logsum - t_logsum))                        # (TB, 1)

    # --- CrossEntropy on un-scaled logits: ce_row = m + lse - s[label] ---
    if int_T is not None:
        # exp(d) == exp(d/T)**T exactly for integer T; reuse e_T (saves one EUP exp).
        exp_d = e_T
        for _ in range(int_T - 1):
            exp_d = exp_d * e_T
    else:
        exp_d = jnp.exp(d)
    lse = jnp.log(jnp.sum(exp_d, axis=-1, keepdims=True))     # (TB, 1)
    lane = jax.lax.broadcasted_iota(jnp.int32, (TB, C), 1)
    s_label = jnp.sum(jnp.where(lane == lbl, s, jnp.float32(0.0)),
                      axis=-1, keepdims=True)                 # (TB, 1)
    ce_row = m + lse - s_label                                # (TB, 1)

    kl_part = jnp.sum(kl_row * valid)
    ce_part = jnp.sum(ce_row * valid)
    partial = (jnp.float32(alpha_distil) * T2 * kl_part
               + jnp.float32(alpha_hard) * ce_part) * inv_B
    out_ref[...] = jnp.reshape(partial, (1, 1, 1))


def _vmem_capacity_bytes(default=64 * 1024 * 1024):
    try:
        cap = int(pltpu.get_tpu_info().vmem_capacity_bytes)
        if cap > 0:
            return cap
    except Exception:
        pass
    return default  # conservative (v7x has 64 MiB / TC)


def distillation_loss(student_logits, teacher_logits, labels, *,
                      temperature=2.0, alpha_distil=0.5, alpha_hard=0.5,
                      block_rows=None):
    """JAX/Pallas equivalent of DistillationLoss.forward. Returns scalar f32.

    For large B*C prefer bf16 logits: the kernel upcasts to f32 in-register and is
    HBM-bandwidth-bound on v5e/v6e, so bf16 inputs roughly halve wall-clock there.
    """
    B, C = student_logits.shape
    itemsize = max(jnp.dtype(student_logits.dtype).itemsize,
                   jnp.dtype(teacher_logits.dtype).itemsize)

    # --- generation-aware per-step budget / tile cap ---
    vmem_cap = _vmem_capacity_bytes()
    if vmem_cap >= 96 * 1024 * 1024:      # 128-MiB VMEM parts (v5e / v6e)
        budget, tb_cap = 32 * 1024 * 1024, 1024
    else:                                  # 64-MiB VMEM parts (v7x)
        budget, tb_cap = 16 * 1024 * 1024, 512

    # Live per-row footprint: 2 inputs x 2 pipeline buffers + ~7 f32 (TB,C) temps.
    bytes_per_row = C * (2 * 2 * itemsize + 7 * 4)

    if block_rows is None:
        tb = (budget // max(bytes_per_row, 1)) // 8 * 8
        tb = int(max(8, min(tb_cap, tb)))
    else:
        tb = int(block_rows)

    b_pad8 = -(-B // 8) * 8
    tb = min(tb, b_pad8)
    # Guarantee >=2 (prefer >=4) grid blocks so v7x megacore splitting and
    # DMA/compute pipelining engage whenever the batch is big enough.
    if block_rows is None and b_pad8 >= 16:
        target_blocks = 4 if b_pad8 >= 32 else 2
        tb = min(tb, max(8, (b_pad8 // target_blocks) // 8 * 8))

    b_pad = -(-B // tb) * tb
    num_blocks = b_pad // tb

    if b_pad != B:
        pad = b_pad - B
        student_logits = jnp.pad(student_logits, ((0, pad), (0, 0)))
        teacher_logits = jnp.pad(teacher_logits, ((0, pad), (0, 0)))
        labels = jnp.pad(labels, ((0, pad),))
    labels2d = labels.astype(jnp.int32).reshape(b_pad, 1)

    T = float(temperature)
    rT = round(T)
    int_T = int(rT) if (abs(T - rT) < 1e-6 and 1 <= rT <= 4) else None

    kernel = functools.partial(
        _distill_kernel,
        temperature=T,
        alpha_distil=float(alpha_distil),
        alpha_hard=float(alpha_hard),
        batch_size=B,
        int_T=int_T,
    )

    # VMEM limit: double-buffered inputs + f32 working set; keep 20% physical
    # headroom for Mosaic internal scratch / semaphores (matters on v7x, 64 MiB).
    vmem_est = 2 * 2 * tb * C * itemsize + 7 * tb * C * 4 + (2 << 20)
    vmem_limit = int(min(int(0.8 * vmem_cap), max(32 * 1024 * 1024, vmem_est)))
    vmem_limit = max(vmem_limit, 16 * 1024 * 1024)

    grid_spec = pltpu.PrefetchScalarGridSpec(
        num_scalar_prefetch=0,
        grid=(num_blocks,),
        in_specs=[
            pl.BlockSpec((tb, C), lambda i: (i, 0)),   # student tile
            pl.BlockSpec((tb, C), lambda i: (i, 0)),   # teacher tile
            pl.BlockSpec((tb, 1), lambda i: (i, 0)),   # labels tile
        ],
        out_specs=pl.BlockSpec((1, 1, 1), lambda i: (i, 0, 0)),  # per-block partial
    )

    partials = pl.pallas_call(
        kernel,
        out_shape=jax.ShapeDtypeStruct((num_blocks, 1, 1), jnp.float32),
        grid_spec=grid_spec,
        compiler_params=pltpu.CompilerParams(
            dimension_semantics=("parallel",),
            vmem_limit_bytes=vmem_limit,
        ),
    )(student_logits, teacher_logits, labels2d)

    return jnp.sum(partials)


def _reference(student_logits, teacher_logits, labels, *,
               temperature=2.0, alpha_distil=0.5, alpha_hard=0.5):
    # Pure-JAX reference mirroring the PyTorch module.
    T = temperature
    t_probs = jax.nn.softmax(teacher_logits / T, axis=-1)
    s_logp_T = jax.nn.log_softmax(student_logits / T, axis=-1)
    t_logp = jax.nn.log_softmax(teacher_logits / T, axis=-1)
    B = student_logits.shape[0]
    kl = jnp.sum(t_probs * (t_logp - s_logp_T)) / B
    distil = kl * T * T
    logp = jax.nn.log_softmax(student_logits, axis=-1)
    ce = -jnp.mean(jnp.take_along_axis(logp, labels[:, None], axis=-1))
    return alpha_distil * distil + alpha_hard * ce


if __name__ == "__main__":
    key = jax.random.PRNGKey(0)
    k1, k2, k3, k4, k5, k6 = jax.random.split(key, 6)

    # Tolerances are loosened slightly: the approx reciprocal (EUP vrcp) and the
    # integer-T exp-squaring differ from the reference at the few-ULP level.
    TOL = dict(atol=2e-3, rtol=2e-3)

    # Case 1: small, lane-aligned shapes.
    B, C = 8, 128
    student = jax.random.normal(k1, (B, C), dtype=jnp.float32) * 2.0
    teacher = jax.random.normal(k2, (B, C), dtype=jnp.float32) * 2.0
    labels = jax.random.randint(k3, (B,), 0, C, dtype=jnp.int32)

    loss = jax.block_until_ready(distillation_loss(student, teacher, labels))
    ref = _reference(student, teacher, labels)
    assert jnp.allclose(loss, ref, **TOL), (loss, ref)

    # Case 2: un-aligned batch/class sizes (exercises padding + row masking + 2 blocks).
    B2, C2 = 10, 100
    student2 = jax.random.normal(k4, (B2, C2), dtype=jnp.float32) * 2.0
    teacher2 = jax.random.normal(k5, (B2, C2), dtype=jnp.float32) * 2.0
    labels2 = jax.random.randint(k6, (B2,), 0, C2, dtype=jnp.int32)

    loss2 = jax.block_until_ready(distillation_loss(student2, teacher2, labels2))
    ref2 = _reference(student2, teacher2, labels2)
    assert jnp.allclose(loss2, ref2, **TOL), (loss2, ref2)

    print("KERNEL_OK")
</pallas_src>

<mosaic_0001>
module attributes {stable_mosaic.version = 11 : i64} {
  func.func @_distill_kernel(%arg0: i32, %arg1: memref<8x128xf32, #tpu.memory_space<vmem>>, %arg2: memref<8x128xf32, #tpu.memory_space<vmem>>, %arg3: memref<8x1xi32, #tpu.memory_space<vmem>>, %arg4: memref<1x1x1xf32, #tpu.memory_space<vmem>>) attributes {dimension_semantics = [#tpu.dimension_semantics<parallel>], iteration_bounds = array<i64: 1>, scalar_prefetch = 0 : i64, scratch_operands = 0 : i64, tpu.core_type = #tpu.core_type<tc>, window_params = [{transform_indices = @transform_0, window_bounds = array<i64: 8, 128>}, {transform_indices = @transform_1, window_bounds = array<i64: 8, 128>}, {transform_indices = @transform_2, window_bounds = array<i64: 8, 1>}, {transform_indices = @transform_3, window_bounds = array<i64: 1, 1, 1>}]} {
    %c0 = arith.constant 0 : index
    %c0_0 = arith.constant 0 : index
    %0 = vector.load %arg1[%c0, %c0_0] : memref<8x128xf32, #tpu.memory_space<vmem>>, vector<8x128xf32>
    %c0_1 = arith.constant 0 : index
    %c0_2 = arith.constant 0 : index
    %1 = vector.load %arg2[%c0_1, %c0_2] : memref<8x128xf32, #tpu.memory_space<vmem>>, vector<8x128xf32>
    %c0_3 = arith.constant 0 : index
    %c0_4 = arith.constant 0 : index
    %2 = vector.load %arg3[%c0_3, %c0_4] : memref<8x1xi32, #tpu.memory_space<vmem>>, vector<8x1xi32>
    %c8_i32 = arith.constant 8 : i32
    %3 = arith.muli %arg0, %c8_i32 : i32
    %4 = tpu.iota {dimensions = array<i32: 0>} : vector<8x1xi32>
    %5 = vector.broadcast %3 : i32 to vector<8x1xi32>
    %6 = arith.addi %5, %4 : vector<8x1xi32>
    %c8_i32_5 = arith.constant 8 : i32
    %7 = vector.broadcast %c8_i32_5 : i32 to vector<8x1xi32>
    %8 = arith.cmpi slt, %6, %7 : vector<8x1xi32>
    %9 = arith.extui %8 : vector<8x1xi1> to vector<8x1xi32>
    %10 = arith.sitofp %9 : vector<8x1xi32> to vector<8x1xf32>
    %cst = arith.constant 5.000000e-01 : f32
    %11 = vector.broadcast %cst : f32 to vector<8x128xf32>
    %12 = arith.mulf %1, %11 : vector<8x128xf32>
    %cst_6 = arith.constant dense<0xFF800000> : vector<8xf32>
    %13 = vector.multi_reduction <maximumf>, %12, %cst_6 [1] : vector<8x128xf32> to vector<8xf32>
    %14 = vector.shape_cast %13 : vector<8xf32> to vector<8x1xf32>
    %15 = vector.broadcast %14 : vector<8x1xf32> to vector<8x128xf32>
    %16 = arith.subf %12, %15 : vector<8x128xf32>
    %17 = math.exp %16 : vector<8x128xf32>
    %cst_7 = arith.constant dense<0.000000e+00> : vector<8xf32>
    %18 = vector.multi_reduction <add>, %17, %cst_7 [1] : vector<8x128xf32> to vector<8xf32>
    %19 = vector.shape_cast %18 : vector<8xf32> to vector<8x1xf32>
    %20 = math.log %19 : vector<8x1xf32>
    %cst_8 = arith.constant dense<0xFF800000> : vector<8xf32>
    %21 = vector.multi_reduction <maximumf>, %0, %cst_8 [1] : vector<8x128xf32> to vector<8xf32>
    %22 = vector.shape_cast %21 : vector<8xf32> to vector<8x1xf32>
    %23 = vector.broadcast %22 : vector<8x1xf32> to vector<8x128xf32>
    %24 = arith.subf %0, %23 : vector<8x128xf32>
    %cst_9 = arith.constant 5.000000e-01 : f32
    %25 = vector.broadcast %cst_9 : f32 to vector<8x128xf32>
    %26 = arith.mulf %24, %25 : vector<8x128xf32>
    %27 = math.exp %26 : vector<8x128xf32>
    %cst_10 = arith.constant dense<0.000000e+00> : vector<8xf32>
    %28 = vector.multi_reduction <add>, %27, %cst_10 [1] : vector<8x128xf32> to vector<8xf32>
    %29 = vector.shape_cast %28 : vector<8xf32> to vector<8x1xf32>
    %30 = math.log %29 : vector<8x1xf32>
    %31 = tpu.reciprocal %19 {approx = true} : vector<8x1xf32> -> vector<8x1xf32>
    %32 = arith.subf %16, %26 : vector<8x128xf32>
    %33 = arith.mulf %17, %32 : vector<8x128xf32>
    %cst_11 = arith.constant dense<0.000000e+00> : vector<8xf32>
    %34 = vector.multi_reduction <add>, %33, %cst_11 [1] : vector<8x128xf32> to vector<8xf32>
    %35 = vector.shape_cast %34 : vector<8xf32> to vector<8x1xf32>
    %36 = arith.mulf %31, %35 : vector<8x1xf32>
    %37 = arith.subf %30, %20 : vector<8x1xf32>
    %38 = arith.addf %36, %37 : vector<8x1xf32>
    %39 = arith.mulf %27, %27 : vector<8x128xf32>
    %cst_12 = arith.constant dense<0.000000e+00> : vector<8xf32>
    %40 = vector.multi_reduction <add>, %39, %cst_12 [1] : vector<8x128xf32> to vector<8xf32>
    %41 = vector.shape_cast %40 : vector<8xf32> to vector<8x1xf32>
    %42 = math.log %41 : vector<8x1xf32>
    %43 = tpu.iota {dimensions = array<i32: 1>} : vector<8x128xi32>
    %44 = vector.broadcast %2 : vector<8x1xi32> to vector<8x128xi32>
    %45 = arith.cmpi eq, %43, %44 : vector<8x128xi32>
    %cst_13 = arith.constant 0.000000e+00 : f32
    %46 = vector.broadcast %cst_13 : f32 to vector<8x128xf32>
    %47 = arith.select %45, %0, %46 : vector<8x128xi1>, vector<8x128xf32>
    %cst_14 = arith.constant dense<0.000000e+00> : vector<8xf32>
    %48 = vector.multi_reduction <add>, %47, %cst_14 [1] : vector<8x128xf32> to vector<8xf32>
    %49 = vector.shape_cast %48 : vector<8xf32> to vector<8x1xf32>
    %50 = arith.addf %22, %42 : vector<8x1xf32>
    %51 = arith.subf %50, %49 : vector<8x1xf32>
    %52 = arith.mulf %38, %10 : vector<8x1xf32>
    %53 = vector.shape_cast %52 : vector<8x1xf32> to vector<1x8x1xf32>
    %cst_15 = arith.constant dense<0.000000e+00> : vector<1xf32>
    %54 = vector.multi_reduction <add>, %53, %cst_15 [1, 2] : vector<1x8x1xf32> to vector<1xf32>
    %55 = vector.shape_cast %54 : vector<1xf32> to vector<1x1x1xf32>
    %56 = vector.extract %55[0, 0, 0] : f32 from vector<1x1x1xf32>
    %57 = arith.mulf %51, %10 : vector<8x1xf32>
    %58 = vector.shape_cast %57 : vector<8x1xf32> to vector<1x8x1xf32>
    %cst_16 = arith.constant dense<0.000000e+00> : vector<1xf32>
    %59 = vector.multi_reduction <add>, %58, %cst_16 [1, 2] : vector<1x8x1xf32> to vector<1xf32>
    %60 = vector.shape_cast %59 : vector<1xf32> to vector<1x1x1xf32>
    %61 = vector.extract %60[0, 0, 0] : f32 from vector<1x1x1xf32>
    %cst_17 = arith.constant 5.000000e-01 : f32
    %cst_18 = arith.constant 4.000000e+00 : f32
    %62 = arith.mulf %cst_17, %cst_18 : f32
    %63 = arith.mulf %62, %56 : f32
    %cst_19 = arith.constant 5.000000e-01 : f32
    %64 = arith.mulf %cst_19, %61 : f32
    %65 = arith.addf %63, %64 : f32
    %cst_20 = arith.constant 1.250000e-01 : f32
    %66 = arith.mulf %65, %cst_20 : f32
    %67 = vector.broadcast %66 : f32 to vector<1x1x1xf32>
    %c0_21 = arith.constant 0 : index
    %c0_22 = arith.constant 0 : index
    %c0_23 = arith.constant 0 : index
    %68 = vector.load %arg4[%c0_21, %c0_22, %c0_23] : memref<1x1x1xf32, #tpu.memory_space<vmem>>, vector<1x1x1xf32>
    tpu.vector_store %arg4[%c0_21, %c0_22, %c0_23], %67 {strides = array<i32>} : memref<1x1x1xf32, #tpu.memory_space<vmem>>, vector<1x1x1xf32>,
    return
  }
  func.func @transform_0(%arg0: i32) -> (i32, i32) {
    %c0_i32 = arith.constant 0 : i32
    %c0_i32_0 = arith.constant 0 : i32
    return %arg0, %c0_i32 : i32, i32
  }
  func.func @transform_1(%arg0: i32) -> (i32, i32) {
    %c0_i32 = arith.constant 0 : i32
    %c0_i32_0 = arith.constant 0 : i32
    return %arg0, %c0_i32 : i32, i32
  }
  func.func @transform_2(%arg0: i32) -> (i32, i32) {
    %c0_i32 = arith.constant 0 : i32
    %c0_i32_0 = arith.constant 0 : i32
    return %arg0, %c0_i32 : i32, i32
  }
  func.func @transform_3(%arg0: i32) -> (i32, i32, i32) {
    %c0_i32 = arith.constant 0 : i32
    %c0_i32_0 = arith.constant 0 : i32
    %c0_i32_1 = arith.constant 0 : i32
    return %arg0, %c0_i32, %c0_i32_0 : i32, i32, i32
  }
}

</mosaic_0001>

<llo_original>
// kernel: tpu_custom_call.1
$region0: #{tpu_custom_call.1}
  #allocation0 [shape = 'u32[]', space=smem, size = 0x4, offset = 0x4, fixed_abs, tag = 'smem constant byte address 0x4 - core index']
  #allocation1 [shape = 'u32[144,128]{1,0:T(1,128)}', space=vmem, size = 0x12000, scoped, tag = 'internal scratch']
  %s0 = inlined_call_operand.vmem [shape: f32[8,128], index: 0, kind: input, shape index: {}]
  %s1 = inlined_call_operand.hbm [shape: f32[8,128], index: 1, kind: input, shape index: {}]
  %s2 = inlined_call_operand.vmem [shape: s32[8,1], index: 2, kind: input, shape index: {}]
  %s3 = inlined_call_operand.hbm [shape: f32[1,1,1], index: 3, kind: output, shape index: {}]
  %s4 = sld [smem:[#allocation0]]
  $region26: #{tpu_custom_call.1} parent=0
    _
  %s6 = ssub.s32 1, %s4
  %s7 = scalar_select 0, %s6, %s4
  $region1: #{tpu_custom_call.1} parent=0
    #allocation2 [shape = 'u8[4096]{0}', space=vmem, size = 0x1000, scoped, tag = 'input window, operand 1, single buffered']
    #allocation3 [shape = 's32[1]{0}', space=sflag, size = 0x4, scoped, tag = 'scoped memory for tpu_custom_call.1']
    #allocation4 [shape = 's32[1]{0}', space=sflag, size = 0x4, scoped, tag = 'scoped memory for tpu_custom_call.1']
    #allocation5 [shape = 'u8[512]{0}', space=vmem, size = 0x400, scoped, tag = 'output window, operand 0, single buffered']
    %8 = vsyncpa [#allocation3], 0
    %9 = vsyncpa [#allocation4], 0
    // Predicated region
    $region2: #{tpu_custom_call.1} parent=1 // pred_check
      _
    $region3: #{tpu_custom_call.1} parent=1 // pred_check_branch
      %11 = sbr.rel (0) target = $region5
    $region4: #{tpu_custom_call.1} parent=1 // pred_region
      _
    $region5: #{tpu_custom_call.1} parent=1 // pred_fallthru
      _
    // Predicated region
    $region6: #{tpu_custom_call.1} parent=1 // pred_check
      _
    $region7: #{tpu_custom_call.1} parent=1 // pred_check_branch
      %13 = sbr.rel (0) target = $region9
    $region8: #{tpu_custom_call.1} parent=1 // pred_region
      %s15 = ssub.s32 128, 128
      %16 = vsyncadd [#allocation3], %s15
      %s18 = sshll.u32 [#allocation2], 4
      %s19 = int_to_ptr.vmem [resolvable:$true] %s18
      %21 = dma.hbm_to_vmem [thread:$0]  %s1, 128, %s19, [#allocation3]
    $region9: #{tpu_custom_call.1} parent=1 // pred_fallthru
      _
    // Predicated region
    $region10: #{tpu_custom_call.1} parent=1 // pred_check
      _
    $region11: #{tpu_custom_call.1} parent=1 // pred_check_branch
      %23 = sbr.rel (0) target = $region13
    $region12: #{tpu_custom_call.1} parent=1 // pred_region
      _
    $region13: #{tpu_custom_call.1} parent=1 // pred_fallthru
      _
    // Predicated region
    $region14: #{tpu_custom_call.1} parent=1 // pred_check
      _
    $region15: #{tpu_custom_call.1} parent=1 // pred_check_branch
      %25 = sbr.rel (0) target = $region17
    $region16: #{tpu_custom_call.1} parent=1 // pred_region
      %26 = dma.done [#allocation3], 128
    $region17: #{tpu_custom_call.1} parent=1 // pred_fallthru
      _
    %v27 = vld [vmem:[%s0] sm:$0xff]
    %v28 = vld [vmem:[#allocation2] sm:$0xff]
    %v29 = vld [vmem:[%s2] sm:$0xff]
    %s30 = smul.u32 0, 8
    %v31 = vlaneseq
    %v32 = vshrl.u32 %v31, 7
    %v33 = vstv %s30
    %v34 = vadd.s32 %v33, %v32
    %vm35 = vcmp.lt.s32.totalorder %v34, 8
    %v36 = vsel %vm35, 1, 0
    %v37 = vcvt.s32.f32 %v36
    %v38 = vmul.f32 %v28, 0.5
    %39 = vmax.xlane.f32.xlu0 %v38
    %v40 = vpop.xlane.xlu0 %39
    %v41 = vsub.f32 %v38, %v40
    %v42 = vmul.f32 %v41, 1.442695
    %v43 = vpow.pop %v42
    %44 = vadd.xlane.f32.xlu0 %v43
    %v45 = vpop.xlane.xlu0 %44
    %v46 = vlog2.pop %v45
    %v47 = vmul.f32 %v46, 0.6931472
    %48 = vmax.xlane.f32.xlu0 %v27
    %v49 = vpop.xlane.xlu0 %48
    %v50 = vsub.f32 %v27, %v49
    %v51 = vmul.f32 %v50, 0.5
    %v52 = vmul.f32 %v51, 1.442695
    %v53 = vpow.pop %v52
    %54 = vadd.xlane.f32.xlu0 %v53
    %v55 = vpop.xlane.xlu0 %54
    %v56 = vlog2.pop %v55
    %v57 = vmul.f32 %v56, 0.6931472
    %v58 = vrcp.pop %v45
    %v59 = vsub.f32 %v41, %v51
    %v60 = vmul.f32 %v43, %v59
    %61 = vadd.xlane.f32.xlu0 %v60
    %v62 = vpop.xlane.xlu0 %61
    %v63 = vmul.f32 %v58, %v62
    %v64 = vsub.f32 %v57, %v47
    %v65 = vadd.f32 %v63, %v64
    %v66 = vmul.f32 %v53, %v53
    %67 = vadd.xlane.f32.xlu0 %v66
    %v68 = vpop.xlane.xlu0 %67
    %v69 = vlog2.pop %v68
    %v70 = vmul.f32 %v69, 0.6931472
    %v71 = vlaneseq
    %v72 = vand.u32 %v71, 127
    %73 = vset.pattern.permute.xlu0 0
    %74 = vperm.xlu0 %73, %v29
    %v75 = vpop.permute.xlu0 %74
    %vm76 = vcmp.eq.s32.totalorder %v72, %v75
    %v77 = vsel %vm76, %v27, 0.0
    %78 = vadd.xlane.f32.xlu0 %v77
    %v79 = vpop.xlane.xlu0 %78
    %v80 = vadd.f32 %v49, %v70
    %v81 = vsub.f32 %v80, %v79
    %v82 = vmul.f32 %v65, %v37
    %vm83 = vcmask 7168
    %v84 = vsel %vm83, %v82, 0.0
    %85 = vadd.xlane.f32.xlu0 %v84
    %v86 = vpop.xlane.xlu0 %85
    %v87 = vrot.slane %v86, 4
    %v88 = vadd.f32 %v86, %v87
    %v89 = vrot.slane %v88, 2
    %v90 = vadd.f32 %v88, %v89
    %v91 = vrot.slane %v90, 1
    %v92 = vadd.f32 %v90, %v91
    %s93 = vtos %v92
    %v94 = vmul.f32 %v81, %v37
    %v95 = vsel %vm83, %v94, 0.0
    %96 = vadd.xlane.f32.xlu0 %v95
    %v97 = vpop.xlane.xlu0 %96
    %v98 = vrot.slane %v97, 4
    %v99 = vadd.f32 %v97, %v98
    %v100 = vrot.slane %v99, 2
    %v101 = vadd.f32 %v99, %v100
    %v102 = vrot.slane %v101, 1
    %v103 = vadd.f32 %v101, %v102
    %s104 = vtos %v103
    %s105 = smul.f32 %s93, 2.0
    %s106 = smul.f32 %s104, 0.5
    %s107 = sadd.f32 %s105, %s106
    %s108 = smul.f32 %s107, 0.125
    %v109 = vstv %s108
    %vm110 = vcmask 0
    %111 = vst.msk [vmem:[#allocation5] sm:$0x1] %vm110, %v109
    // Predicated region
    $region18: #{tpu_custom_call.1} parent=1 // pred_check
      _
    $region19: #{tpu_custom_call.1} parent=1 // pred_check_branch
      %113 = sbr.rel (0) target = $region21
    $region20: #{tpu_custom_call.1} parent=1 // pred_region
      %s115 = ssub.s32 16, 16
      %116 = vsyncadd [#allocation4], %s115
      %s118 = sshll.u32 [#allocation5], 4
      %s119 = int_to_ptr.vmem [resolvable:$true] %s118
      %121 = dma.vmem_to_hbm [thread:$0]  %s119, 16, %s3, [#allocation4]
    $region21: #{tpu_custom_call.1} parent=1 // pred_fallthru
      _
    // Predicated region
    $region22: #{tpu_custom_call.1} parent=1 // pred_check
      _
    $region23: #{tpu_custom_call.1} parent=1 // pred_check_branch
      %123 = sbr.rel (0) target = $region25
    $region24: #{tpu_custom_call.1} parent=1 // pred_region
      %124 = dma.done [#allocation4], 16
    $region25: #{tpu_custom_call.1} parent=1 // pred_fallthru
      _
    %125 = vsyncpa [#allocation3], 1
    %126 = vsyncpa [#allocation4], 1

</llo_original>
